<compile_context>
chip_gen: v7x
topology: tpu7x:2x2x1
jax: 0.10.0
libtpu: 0.0.40
codegen_flags: <defaults>
</compile_context>

<pallas_src>
import jax
import jax.numpy as jnp
from jax.experimental import pallas as pl
from jax.experimental.pallas import tpu as pltpu


def _make_kernel(emb_dim):
    E = emb_dim

    def kernel(x_ref, wt_ref, b_ref, eps_ref, c_ref, kl_ref):
        # Initialize the KL accumulator (resident SMEM scalar) on the first block.
        @pl.when(pl.program_id(0) == 0)
        def _init():
            kl_ref[0, 0] = 0.0

        x = x_ref[...].astype(jnp.float32)                       # (TB, noise_dim)
        wt = wt_ref[...].astype(jnp.float32)                     # (noise_dim, 2E)

        # Linear layer: one MXU matmul (K = noise_dim, N = 2*emb_dim, lane-dense).
        out = jnp.dot(x, wt, preferred_element_type=jnp.float32)
        out = out + b_ref[...].astype(jnp.float32)               # (TB, 2E)

        # LeakyReLU(0.2) on the VPU.
        out = jnp.where(out > 0, out, 0.2 * out)

        mean = out[:, :E]                                        # (TB, E)
        log_sigma = out[:, E:]                                   # (TB, E)

        # Reparameterization: c = mean + exp(log_sigma) * eps  (exp on the EUP).
        std = jnp.exp(log_sigma)
        c_ref[...] = (mean + std * eps_ref[...].astype(jnp.float32)).astype(c_ref.dtype)

        # KL elementwise term; exp(2*log_sigma) reused as std*std (no second exp).
        kl_elem = -log_sigma + 0.5 * (std * std + mean * mean - 1.0)
        kl_ref[0, 0] = kl_ref[0, 0] + jnp.sum(kl_elem)

    return kernel


def _pick_block_b(B):
    # Whole batch in one block unless B is large; tiles must be multiples of 8 rows.
    if B <= 512:
        return B
    for cand in (512, 256, 128, 64, 32, 16, 8):
        if B % cand == 0:
            return cand
    return B


def cond_embedding_pallas(x, weight, bias, eps):
    """condEmbedding.forward as a fused Pallas TPU kernel.

    x:      (B, noise_dim) inputs
    weight: (2*emb_dim, noise_dim)  PyTorch nn.Linear weight layout
    bias:   (2*emb_dim,)
    eps:    (B, emb_dim) standard-normal noise (torch.randn equivalent)
    returns (c, kl_loss) with c: (B, emb_dim), kl_loss: scalar f32
    """
    B, noise_dim = x.shape
    two_e, nd2 = weight.shape
    assert nd2 == noise_dim and two_e % 2 == 0
    E = two_e // 2
    assert eps.shape == (B, E)

    wt = jnp.transpose(weight)            # (noise_dim, 2E), done once outside the kernel
    b2 = bias.reshape(1, two_e)

    block_b = _pick_block_b(B)
    nb = B // block_b

    c, kl_sum = pl.pallas_call(
        _make_kernel(E),
        out_shape=(
            jax.ShapeDtypeStruct((B, E), x.dtype),
            jax.ShapeDtypeStruct((1, 1), jnp.float32),
        ),
        grid_spec=pltpu.PrefetchScalarGridSpec(
            num_scalar_prefetch=0,
            grid=(nb,),
            in_specs=[
                pl.BlockSpec((block_b, noise_dim), lambda i: (i, 0)),   # x tile
                pl.BlockSpec((noise_dim, two_e), lambda i: (0, 0)),     # W^T (resident)
                pl.BlockSpec((1, two_e), lambda i: (0, 0)),             # bias (resident)
                pl.BlockSpec((block_b, E), lambda i: (i, 0)),           # eps tile
            ],
            out_specs=[
                pl.BlockSpec((block_b, E), lambda i: (i, 0)),           # c tile
                pl.BlockSpec(memory_space=pltpu.MemorySpace.SMEM),      # KL sum scalar
            ],
        ),
        compiler_params=pltpu.CompilerParams(
            # "arbitrary": the KL output accumulates across batch blocks.
            dimension_semantics=("arbitrary",)),
    )(x, wt, b2, eps)

    kl_loss = kl_sum[0, 0] / jnp.float32(B * E)
    return c, kl_loss


def cond_embedding_ref(x, weight, bias, eps):
    """Pure-JAX reference mirroring the PyTorch module."""
    out = x @ weight.T + bias
    out = jnp.where(out > 0, out, 0.2 * out)                    # LeakyReLU(0.2)
    E = weight.shape[0] // 2
    mean = out[:, :E]
    log_sigma = out[:, E:]
    c = mean + jnp.exp(log_sigma) * eps
    kl = jnp.mean(-log_sigma + 0.5 * (-1.0 + jnp.exp(2.0 * log_sigma) + mean ** 2))
    return c, kl


if __name__ == "__main__":
    # Small shapes consistent with condEmbedding (emb_dim=128 is the LaplacianGan default);
    # 128-multiples keep lanes dense, batch 8 fills one sublane tile.
    B, noise_dim, emb_dim = 8, 128, 128

    key = jax.random.PRNGKey(0)
    kx, kw, kb, ke = jax.random.split(key, 4)
    x = jax.random.normal(kx, (B, noise_dim), dtype=jnp.float32)
    weight = 0.02 * jax.random.normal(kw, (2 * emb_dim, noise_dim), dtype=jnp.float32)
    bias = 0.05 * jax.random.normal(kb, (2 * emb_dim,), dtype=jnp.float32)
    eps = jax.random.normal(ke, (B, emb_dim), dtype=jnp.float32)

    c, kl = cond_embedding_pallas(x, weight, bias, eps)
    c = jax.block_until_ready(c)
    kl = jax.block_until_ready(kl)

    c_ref, kl_ref = cond_embedding_ref(x, weight, bias, eps)

    assert c.shape == (B, emb_dim)
    assert jnp.allclose(c, c_ref, atol=1e-2, rtol=1e-2), (
        float(jnp.max(jnp.abs(c - c_ref))))
    assert jnp.allclose(kl, kl_ref, atol=1e-2, rtol=1e-2), (float(kl), float(kl_ref))
    print("KERNEL_OK")
</pallas_src>

<mosaic_0001>
module attributes {stable_mosaic.version = 11 : i64} {
  func.func @kernel(%arg0: i32, %arg1: memref<8x128xf32, #tpu.memory_space<vmem>>, %arg2: memref<128x256xf32, #tpu.memory_space<vmem>>, %arg3: memref<1x256xf32, #tpu.memory_space<vmem>>, %arg4: memref<8x128xf32, #tpu.memory_space<vmem>>, %arg5: memref<8x128xf32, #tpu.memory_space<vmem>>, %arg6: memref<1x1xf32, #tpu.memory_space<smem>>) attributes {dimension_semantics = [#tpu.dimension_semantics<arbitrary>], iteration_bounds = array<i64: 1>, scalar_prefetch = 0 : i64, scratch_operands = 0 : i64, tpu.core_type = #tpu.core_type<tc>, window_params = [{transform_indices = @transform_0, window_bounds = array<i64: 8, 128>}, {pipeline_mode = #tpu.pipeline_mode<synchronous>, transform_indices = @transform_1, window_bounds = array<i64: 128, 256>}, {pipeline_mode = #tpu.pipeline_mode<synchronous>, transform_indices = @transform_2, window_bounds = array<i64: 1, 256>}, {transform_indices = @transform_3, window_bounds = array<i64: 8, 128>}, {transform_indices = @transform_4, window_bounds = array<i64: 8, 128>}, {transform_indices = @transform_5, window_bounds = array<i64: 1, 1>}]} {
    %c0_i32 = arith.constant 0 : i32
    %0 = arith.cmpi eq, %arg0, %c0_i32 : i32
    %1 = arith.extui %0 : i1 to i32
    %c0_i32_0 = arith.constant 0 : i32
    %2 = arith.cmpi ne, %1, %c0_i32_0 : i32
    scf.if %2 {
      %cst_20 = arith.constant 0.000000e+00 : f32
      %c0_21 = arith.constant 0 : index
      %c0_22 = arith.constant 0 : index
      %38 = memref.load %arg6[%c0_21, %c0_22] : memref<1x1xf32, #tpu.memory_space<smem>>
      memref.store %cst_20, %arg6[%c0_21, %c0_22] : memref<1x1xf32, #tpu.memory_space<smem>>
    } else {
    }
    %c0 = arith.constant 0 : index
    %c0_1 = arith.constant 0 : index
    %3 = vector.load %arg1[%c0, %c0_1] : memref<8x128xf32, #tpu.memory_space<vmem>>, vector<8x128xf32>
    %c0_2 = arith.constant 0 : index
    %c0_3 = arith.constant 0 : index
    %4 = vector.load %arg2[%c0_2, %c0_3] : memref<128x256xf32, #tpu.memory_space<vmem>>, vector<128x256xf32>
    %cst = arith.constant dense<0.000000e+00> : vector<8x256xf32>
    %5 = tpu.matmul %3, %4, %cst {dimension_numbers = #tpu.dot_dimension_numbers<[1], [0], [0], [1], [0, 0, 1, 1], [], []>} : vector<8x128xf32>, vector<128x256xf32>, vector<8x256xf32> -> vector<8x256xf32>
    %c0_4 = arith.constant 0 : index
    %c0_5 = arith.constant 0 : index
    %6 = vector.load %arg3[%c0_4, %c0_5] : memref<1x256xf32, #tpu.memory_space<vmem>>, vector<1x256xf32>
    %7 = vector.broadcast %6 : vector<1x256xf32> to vector<8x256xf32>
    %8 = arith.addf %5, %7 : vector<8x256xf32>
    %cst_6 = arith.constant 0.000000e+00 : f32
    %9 = vector.broadcast %cst_6 : f32 to vector<8x256xf32>
    %10 = arith.cmpf ogt, %8, %9 : vector<8x256xf32>
    %cst_7 = arith.constant 2.000000e-01 : f32
    %11 = vector.broadcast %cst_7 : f32 to vector<8x256xf32>
    %12 = arith.mulf %11, %8 : vector<8x256xf32>
    %13 = arith.select %10, %8, %12 : vector<8x256xi1>, vector<8x256xf32>
    %14 = vector.extract_strided_slice %13 {offsets = [0, 0], sizes = [8, 128], strides = [1, 1]} : vector<8x256xf32> to vector<8x128xf32>
    %15 = vector.extract_strided_slice %13 {offsets = [0, 128], sizes = [8, 128], strides = [1, 1]} : vector<8x256xf32> to vector<8x128xf32>
    %16 = math.exp %15 : vector<8x128xf32>
    %c0_8 = arith.constant 0 : index
    %c0_9 = arith.constant 0 : index
    %17 = vector.load %arg4[%c0_8, %c0_9] : memref<8x128xf32, #tpu.memory_space<vmem>>, vector<8x128xf32>
    %18 = arith.mulf %16, %17 : vector<8x128xf32>
    %19 = arith.addf %14, %18 : vector<8x128xf32>
    %c0_10 = arith.constant 0 : index
    %c0_11 = arith.constant 0 : index
    %20 = vector.load %arg5[%c0_10, %c0_11] : memref<8x128xf32, #tpu.memory_space<vmem>>, vector<8x128xf32>
    tpu.vector_store %arg5[%c0_10, %c0_11], %19 {strides = array<i32>} : memref<8x128xf32, #tpu.memory_space<vmem>>, vector<8x128xf32>,
    %cst_12 = arith.constant 0.000000e+00 : f32
    %21 = vector.broadcast %cst_12 : f32 to vector<8x128xf32>
    %22 = arith.subf %21, %15 : vector<8x128xf32>
    %23 = arith.mulf %16, %16 : vector<8x128xf32>
    %24 = arith.mulf %14, %14 : vector<8x128xf32>
    %25 = arith.addf %23, %24 : vector<8x128xf32>
    %cst_13 = arith.constant 1.000000e+00 : f32
    %26 = vector.broadcast %cst_13 : f32 to vector<8x128xf32>
    %27 = arith.subf %25, %26 : vector<8x128xf32>
    %cst_14 = arith.constant 5.000000e-01 : f32
    %28 = vector.broadcast %cst_14 : f32 to vector<8x128xf32>
    %29 = arith.mulf %28, %27 : vector<8x128xf32>
    %30 = arith.addf %22, %29 : vector<8x128xf32>
    %c0_15 = arith.constant 0 : index
    %c0_16 = arith.constant 0 : index
    %31 = memref.load %arg6[%c0_15, %c0_16] : memref<1x1xf32, #tpu.memory_space<smem>>
    %32 = vector.shape_cast %30 : vector<8x128xf32> to vector<1x8x128xf32>
    %cst_17 = arith.constant dense<0.000000e+00> : vector<1xf32>
    %33 = vector.multi_reduction <add>, %32, %cst_17 [1, 2] : vector<1x8x128xf32> to vector<1xf32>
    %34 = vector.shape_cast %33 : vector<1xf32> to vector<1x1x1xf32>
    %35 = vector.extract %34[0, 0, 0] : f32 from vector<1x1x1xf32>
    %36 = arith.addf %31, %35 : f32
    %c0_18 = arith.constant 0 : index
    %c0_19 = arith.constant 0 : index
    %37 = memref.load %arg6[%c0_18, %c0_19] : memref<1x1xf32, #tpu.memory_space<smem>>
    memref.store %36, %arg6[%c0_18, %c0_19] : memref<1x1xf32, #tpu.memory_space<smem>>
    return
  }
  func.func @transform_0(%arg0: i32) -> (i32, i32) {
    %c0_i32 = arith.constant 0 : i32
    %c0_i32_0 = arith.constant 0 : i32
    return %arg0, %c0_i32 : i32, i32
  }
  func.func @transform_1(%arg0: i32) -> (i32, i32) {
    %c0_i32 = arith.constant 0 : i32
    %c0_i32_0 = arith.constant 0 : i32
    %c0_i32_1 = arith.constant 0 : i32
    return %c0_i32, %c0_i32_0 : i32, i32
  }
  func.func @transform_2(%arg0: i32) -> (i32, i32) {
    %c0_i32 = arith.constant 0 : i32
    %c0_i32_0 = arith.constant 0 : i32
    %c0_i32_1 = arith.constant 0 : i32
    return %c0_i32, %c0_i32_0 : i32, i32
  }
  func.func @transform_3(%arg0: i32) -> (i32, i32) {
    %c0_i32 = arith.constant 0 : i32
    %c0_i32_0 = arith.constant 0 : i32
    return %arg0, %c0_i32 : i32, i32
  }
  func.func @transform_4(%arg0: i32) -> (i32, i32) {
    %c0_i32 = arith.constant 0 : i32
    %c0_i32_0 = arith.constant 0 : i32
    return %arg0, %c0_i32 : i32, i32
  }
  func.func @transform_5(%arg0: i32) -> (i32, i32) {
    %c0_i32 = arith.constant 0 : i32
    %c0_i32_0 = arith.constant 0 : i32
    %c0_i32_1 = arith.constant 0 : i32
    return %c0_i32, %c0_i32_0 : i32, i32
  }
}

</mosaic_0001>

<llo_original>
// kernel: tpu_custom_call.1
$region0: #{tpu_custom_call.1}
  #allocation0 [shape = 'u32[]', space=smem, size = 0x4, offset = 0x4, fixed_abs, tag = 'smem constant byte address 0x4 - core index']
  #allocation1 [shape = 'u32[144,128]{1,0:T(1,128)}', space=vmem, size = 0x12000, scoped, tag = 'internal scratch']
  %s0 = inlined_call_operand.hbm [shape: f32[8,128], index: 0, kind: input, shape index: {}]
  %s1 = inlined_call_operand.hbm [shape: f32[128,256], index: 1, kind: input, shape index: {}]
  %s2 = inlined_call_operand.vmem [shape: f32[1,256], index: 2, kind: input, shape index: {}]
  %s3 = inlined_call_operand.vmem [shape: f32[8,128], index: 3, kind: input, shape index: {}]
  %s4 = inlined_call_operand.hbm [shape: f32[8,128], index: 4, kind: output, shape index: {0}]
  %s5 = inlined_call_operand.hbm [shape: f32[1,1], index: 5, kind: output, shape index: {1}]
  %6 = xla_tuple %s4, %s5
  %s7 = sld [smem:[#allocation0]]
  $region46: #{tpu_custom_call.1} parent=0
    _
  %s9 = ssub.s32 1, %s7
  %s10 = scalar_select 0, %s9, %s7
  $region1: #{tpu_custom_call.1} parent=0
    #allocation2 [shape = 'u8[4096]{0}', space=vmem, size = 0x1000, scoped, tag = 'input window, operand 0, single buffered']
    #allocation3 [shape = 's32[1]{0}', space=sflag, size = 0x4, scoped, tag = 'scoped memory for tpu_custom_call.1']
    #allocation4 [shape = 's32[1]{0}', space=sflag, size = 0x4, scoped, tag = 'scoped memory for tpu_custom_call.1']
    #allocation5 [shape = 's32[1]{0}', space=sflag, size = 0x4, scoped, tag = 'scoped memory for tpu_custom_call.1']
    #allocation6 [shape = 'u8[131072]{0}', space=vmem, size = 0x20000, scoped, tag = 'input window, operand 1, single buffered']
    #allocation7 [shape = 's32[1]{0}', space=sflag, size = 0x4, scoped, tag = 'scoped memory for tpu_custom_call.1']
    #allocation8 [shape = 'u8[4096]{0}', space=vmem, size = 0x1000, scoped, tag = 'output window, operand 0, single buffered']
    #allocation9 [shape = 'u8[512]{0}', space=smem, size = 0x200, scoped, tag = 'output window, operand 1, single buffered']
    %11 = vsyncpa [#allocation3], 0
    %12 = vsyncpa [#allocation7], 0
    %13 = vsyncpa [#allocation4], 0
    %14 = vsyncpa [#allocation5], 0
    // Predicated region
    $region2: #{tpu_custom_call.1} parent=1 // pred_check
      _
    $region3: #{tpu_custom_call.1} parent=1 // pred_check_branch
      %16 = sbr.rel (0) target = $region5
    $region4: #{tpu_custom_call.1} parent=1 // pred_region
      %s18 = ssub.s32 128, 128
      %19 = vsyncadd [#allocation3], %s18
      %s21 = sshll.u32 [#allocation2], 4
      %s22 = int_to_ptr.vmem [resolvable:$true] %s21
      %24 = dma.hbm_to_vmem [thread:$0]  %s0, 128, %s22, [#allocation3]
    $region5: #{tpu_custom_call.1} parent=1 // pred_fallthru
      _
    // Predicated region
    $region6: #{tpu_custom_call.1} parent=1 // pred_check
      _
    $region7: #{tpu_custom_call.1} parent=1 // pred_check_branch
      %26 = sbr.rel (0) target = $region9
    $region8: #{tpu_custom_call.1} parent=1 // pred_region
      %s28 = ssub.s32 4096, 4096
      %29 = vsyncadd [#allocation7], %s28
      %s30 = sshll.u32 [#allocation6], 4
      %s31 = int_to_ptr.vmem [resolvable:$true] %s30
      %36 = dma.hbm_to_vmem [thread:$0]  %s1, 4096, %s31, [#allocation7], 256, 256, 16
    $region9: #{tpu_custom_call.1} parent=1 // pred_fallthru
      _
    // Predicated region
    $region10: #{tpu_custom_call.1} parent=1 // pred_check
      _
    $region11: #{tpu_custom_call.1} parent=1 // pred_check_branch
      %38 = sbr.rel (0) target = $region13
    $region12: #{tpu_custom_call.1} parent=1 // pred_region
      _
    $region13: #{tpu_custom_call.1} parent=1 // pred_fallthru
      _
    // Predicated region
    $region14: #{tpu_custom_call.1} parent=1 // pred_check
      _
    $region15: #{tpu_custom_call.1} parent=1 // pred_check_branch
      %40 = sbr.rel (0) target = $region17
    $region16: #{tpu_custom_call.1} parent=1 // pred_region
      _
    $region17: #{tpu_custom_call.1} parent=1 // pred_fallthru
      _
    // Predicated region
    $region18: #{tpu_custom_call.1} parent=1 // pred_check
      _
    $region19: #{tpu_custom_call.1} parent=1 // pred_check_branch
      %42 = sbr.rel (0) target = $region21
    $region20: #{tpu_custom_call.1} parent=1 // pred_region
      %43 = dma.done [#allocation3], 128
    $region21: #{tpu_custom_call.1} parent=1 // pred_fallthru
      _
    // Predicated region
    $region22: #{tpu_custom_call.1} parent=1 // pred_check
      _
    $region23: #{tpu_custom_call.1} parent=1 // pred_check_branch
      %45 = sbr.rel (0) target = $region25
    $region24: #{tpu_custom_call.1} parent=1 // pred_region
      %46 = dma.done [#allocation7], 4096
    $region25: #{tpu_custom_call.1} parent=1 // pred_fallthru
      _
    %p47 = scmp.eq.s32.totalorder 0, 0
    // Predicated region
    $region26: #{tpu_custom_call.1} parent=1 // pred_check
      %p48 = pneg %p47
    $region27: #{tpu_custom_call.1} parent=1 // pred_check_branch
      %50 = sbr.rel (%p48) target = $region29
    $region28: #{tpu_custom_call.1} parent=1 // pred_region
      %s51 = scalar_lea.smem [#allocation9], 0
      %52 = sst [smem:[%s51]] 0.0
    $region29: #{tpu_custom_call.1} parent=1 // pred_fallthru
      _
    %v53 = vld [vmem:[#allocation2] sm:$0xff]
    %v54 = vld [vmem:[#allocation6] sm:$0xff]
    %v55 = vld [vmem:[#allocation6 + $0x8] sm:$0xff]
    %v56 = vld [vmem:[#allocation6 + $0x10] sm:$0xff]
    %v57 = vld [vmem:[#allocation6 + $0x18] sm:$0xff]
    %v58 = vld [vmem:[#allocation6 + $0x20] sm:$0xff]
    %v59 = vld [vmem:[#allocation6 + $0x28] sm:$0xff]
    %v60 = vld [vmem:[#allocation6 + $0x30] sm:$0xff]
    %v61 = vld [vmem:[#allocation6 + $0x38] sm:$0xff]
    %v62 = vld [vmem:[#allocation6 + $0x40] sm:$0xff]
    %v63 = vld [vmem:[#allocation6 + $0x48] sm:$0xff]
    %v64 = vld [vmem:[#allocation6 + $0x50] sm:$0xff]
    %v65 = vld [vmem:[#allocation6 + $0x58] sm:$0xff]
    %v66 = vld [vmem:[#allocation6 + $0x60] sm:$0xff]
    %v67 = vld [vmem:[#allocation6 + $0x68] sm:$0xff]
    %v68 = vld [vmem:[#allocation6 + $0x70] sm:$0xff]
    %v69 = vld [vmem:[#allocation6 + $0x78] sm:$0xff]
    %v70 = vld [vmem:[#allocation6 + $0x80] sm:$0xff]
    %v71 = vld [vmem:[#allocation6 + $0x88] sm:$0xff]
    %v72 = vld [vmem:[#allocation6 + $0x90] sm:$0xff]
    %v73 = vld [vmem:[#allocation6 + $0x98] sm:$0xff]
    %v74 = vld [vmem:[#allocation6 + $0xa0] sm:$0xff]
    %v75 = vld [vmem:[#allocation6 + $0xa8] sm:$0xff]
    %v76 = vld [vmem:[#allocation6 + $0xb0] sm:$0xff]
    %v77 = vld [vmem:[#allocation6 + $0xb8] sm:$0xff]
    %v78 = vld [vmem:[#allocation6 + $0xc0] sm:$0xff]
    %v79 = vld [vmem:[#allocation6 + $0xc8] sm:$0xff]
    %v80 = vld [vmem:[#allocation6 + $0xd0] sm:$0xff]
    %v81 = vld [vmem:[#allocation6 + $0xd8] sm:$0xff]
    %v82 = vld [vmem:[#allocation6 + $0xe0] sm:$0xff]
    %v83 = vld [vmem:[#allocation6 + $0xe8] sm:$0xff]
    %v84 = vld [vmem:[#allocation6 + $0xf0] sm:$0xff]
    %v85 = vld [vmem:[#allocation6 + $0xf8] sm:$0xff]
    %v86 = vld [vmem:[%s2] sm:$0x3]
    %v88 = vlaneseq
    %v89 = vshrl.u32 %v88, 7
    %v90 = vsub.s32 0, %v89
    %v91 = vrot.slane %v86, %v90
    %v92 = vlaneseq
    %v93 = vshrl.u32 %v92, 7
    %v94 = vsub.s32 1, %v93
    %v95 = vrot.slane %v86, %v94
    %98 = vmatprep.subr.mxu0 %v55
    %99 = vmatpush1.msra.mxu0 %v54
    %100 = vmatprep.subr.mxu0 %v57
    %101 = vmatpush1.msra.mxu0 %v56
    %102 = vmatprep.subr.mxu0 %v59
    %103 = vmatpush1.msra.mxu0 %v58
    %104 = vmatprep.subr.mxu0 %v61
    %105 = vmatpush1.msra.mxu0 %v60
    %106 = vmatprep.subr.mxu0 %v63
    %107 = vmatpush1.msra.mxu0 %v62
    %108 = vmatprep.subr.mxu0 %v65
    %109 = vmatpush1.msra.mxu0 %v64
    %110 = vmatprep.subr.mxu0 %v67
    %111 = vmatpush1.msra.mxu0 %v66
    %112 = vmatprep.subr.mxu0 %v69
    %113 = vmatpush1.msra.mxu0 %v68
    %114 = vmatprep.subr.mxu0 %v71
    %115 = vmatpush1.msra.mxu0 %v70
    %116 = vmatprep.subr.mxu0 %v73
    %117 = vmatpush1.msra.mxu0 %v72
    %118 = vmatprep.subr.mxu0 %v75
    %119 = vmatpush1.msra.mxu0 %v74
    %120 = vmatprep.subr.mxu0 %v77
    %121 = vmatpush1.msra.mxu0 %v76
    %122 = vmatprep.subr.mxu0 %v79
    %123 = vmatpush1.msra.mxu0 %v78
    %124 = vmatprep.subr.mxu0 %v81
    %125 = vmatpush1.msra.mxu0 %v80
    %126 = vmatprep.subr.mxu0 %v83
    %127 = vmatpush1.msra.mxu0 %v82
    %128 = vmatprep.subr.mxu0 %v85
    %129 = vmatpush1.msra.mxu0 %v84
    %130 = vmatprep.subr.mxu0 0.0
    %131 = vmatpush1.msra.mxu0 0.0
    %132 = vmatprep.subr.mxu0 0.0
    %133 = vmatpush1.msra.mxu0 0.0
    %134 = vmatprep.subr.mxu0 0.0
    %135 = vmatpush1.msra.mxu0 0.0
    %136 = vmatprep.subr.mxu0 0.0
    %137 = vmatpush1.msra.mxu0 0.0
    %138 = vmatprep.subr.mxu0 0.0
    %139 = vmatpush1.msra.mxu0 0.0
    %140 = vmatprep.subr.mxu0 0.0
    %141 = vmatpush1.msra.mxu0 0.0
    %142 = vmatprep.subr.mxu0 0.0
    %143 = vmatpush1.msra.mxu0 0.0
    %144 = vmatprep.subr.mxu0 0.0
    %145 = vmatpush1.msra.mxu0 0.0
    %146 = vmatprep.subr.mxu0 0.0
    %147 = vmatpush1.msra.mxu0 0.0
    %148 = vmatprep.subr.mxu0 0.0
    %149 = vmatpush1.msra.mxu0 0.0
    %150 = vmatprep.subr.mxu0 0.0
    %151 = vmatpush1.msra.mxu0 0.0
    %152 = vmatprep.subr.mxu0 0.0
    %153 = vmatpush1.msra.mxu0 0.0
    %154 = vmatprep.subr.mxu0 0.0
    %155 = vmatpush1.msra.mxu0 0.0
    %156 = vmatprep.subr.mxu0 0.0
    %157 = vmatpush1.msra.mxu0 0.0
    %158 = vmatprep.subr.mxu0 0.0
    %159 = vmatpush1.msra.mxu0 0.0
    %160 = vmatprep.subr.mxu0 0.0
    %161 = vmatpush1.msra.mxu0 0.0
    %162 = vmatprep.mubr.f32.mxu0 0.0
    %163 = vmatmul.mubr.f32.gmra.mrb[0].mxu0 %v53
    %v164 = vpop.f32.mrb[0].mxu0
    %v165 = vadd.f32 %v91, %v164
    %v166 = vpop.f32.mrb[0].mxu0
    %v167 = vadd.f32 %v95, %v166
    %168 = vdwg.mxu0
    %vm169 = vcmp.gt.f32.partialorder %v165, 0.0
    %vm170 = vcmp.gt.f32.partialorder %v167, 0.0
    %v171 = vmul.f32 %v165, 0.2
    %v172 = vmul.f32 %v167, 0.2
    %v173 = vsel %vm169, %v165, %v171
    %v174 = vsel %vm170, %v167, %v172
    %v175 = vmul.f32 %v174, 1.442695
    %v176 = vpow.pop %v175
    %v177 = vld [vmem:[%s3] sm:$0xff]
    %v178 = vmul.f32 %v176, %v177
    %v179 = vadd.f32 %v173, %v178
    %180 = vst [vmem:[#allocation8] sm:$0xff] %v179
    %v181 = vsub.f32 0.0, %v174
    %v182 = vmul.f32 %v176, %v176
    %v183 = vmul.f32 %v173, %v173
    %v184 = vadd.f32 %v182, %v183
    %v185 = vsub.f32 %v184, 1.0
    %v186 = vmul.f32 %v185, 0.5
    %v187 = vadd.f32 %v181, %v186
    %s188 = sld [smem:[#allocation9]]
    %189 = vadd.xlane.f32.xlu0 %v187
    %v190 = vpop.xlane.xlu0 %189
    %v191 = vrot.slane %v190, 4
    %v192 = vadd.f32 %v190, %v191
    %v193 = vrot.slane %v192, 2
    %v194 = vadd.f32 %v192, %v193
    %v195 = vrot.slane %v194, 1
    %v196 = vadd.f32 %v194, %v195
    %s197 = vtos %v196
    %s198 = sadd.f32 %s188, %s197
    %s199 = scalar_lea.smem [#allocation9], 0
    %200 = sst [smem:[%s199]] %s198
    // Predicated region
    $region30: #{tpu_custom_call.1} parent=1 // pred_check
      _
    $region31: #{tpu_custom_call.1} parent=1 // pred_check_branch
      %202 = sbr.rel (0) target = $region33
    $region32: #{tpu_custom_call.1} parent=1 // pred_region
      %s204 = ssub.s32 128, 128
      %205 = vsyncadd [#allocation4], %s204
      %s207 = sshll.u32 [#allocation8], 4
      %s208 = int_to_ptr.vmem [resolvable:$true] %s207
      %210 = dma.vmem_to_hbm [thread:$0]  %s208, 128, %s4, [#allocation4]
    $region33: #{tpu_custom_call.1} parent=1 // pred_fallthru
      _
    // Predicated region
    $region34: #{tpu_custom_call.1} parent=1 // pred_check
      _
    $region35: #{tpu_custom_call.1} parent=1 // pred_check_branch
      %212 = sbr.rel (0) target = $region37
    $region36: #{tpu_custom_call.1} parent=1 // pred_region
      %s214 = ssub.s32 16, 16
      %215 = vsyncadd [#allocation5], %s214
      %218 = dma.smem_to_hbm [#allocation9], 16, %s5, [#allocation5]
    $region37: #{tpu_custom_call.1} parent=1 // pred_fallthru
      _
    // Predicated region
    $region38: #{tpu_custom_call.1} parent=1 // pred_check
      _
    $region39: #{tpu_custom_call.1} parent=1 // pred_check_branch
      %220 = sbr.rel (0) target = $region41
    $region40: #{tpu_custom_call.1} parent=1 // pred_region
      %221 = dma.done [#allocation4], 128
    $region41: #{tpu_custom_call.1} parent=1 // pred_fallthru
      _
    // Predicated region
    $region42: #{tpu_custom_call.1} parent=1 // pred_check
      _
    $region43: #{tpu_custom_call.1} parent=1 // pred_check_branch
      %223 = sbr.rel (0) target = $region45
    $region44: #{tpu_custom_call.1} parent=1 // pred_region
      %224 = dma.done [#allocation5], 16
    $region45: #{tpu_custom_call.1} parent=1 // pred_fallthru
      _
    %225 = sfence
    %226 = vsyncpa [#allocation3], 1
    %227 = vsyncpa [#allocation7], 1
    %228 = vsyncpa [#allocation4], 1
    %229 = vsyncpa [#allocation5], 1

</llo_original>
